<compile_context>
chip_gen: v6e
topology: v6e:2x2x1
jax: 0.10.0
libtpu: 0.0.40
codegen_flags: <defaults>
</compile_context>

<pallas_src>
import jax
import jax.numpy as jnp
from jax.experimental import pallas as pl
from jax.experimental.pallas import tpu as pltpu

# Small, module-consistent shapes (SD conv_in is Conv2d(4, 320, 3, padding=1);
# COUT=32 keeps the example small).
N, CIN, COUT, H, W = 2, 4, 32, 16, 16
KH = KW = 3                      # 3x3 conv, stride 1, padding 1
K = KH * KW * CIN                # 36  — im2col contraction depth
COUT_PAD = 128                   # lane-dense output width (use 256-wide tiles
                                 # on v6e/v7x at production COUT=320)
M = N * H * W                    # 512 — batch folded into matmul M
TM = 256                         # M-tile: 2 pipelined grid steps at toy size;
                                 # 512-2048 at SD sizes (halve on v7x, 64 MiB VMEM)


def twin_conv_kernel(p_ref, w_ref, b_ref, o_ref):
    # p_ref : (TM, K)        bf16 im2col patch tile
    # w_ref : (K, COUT_PAD)  bf16 blended weights (grid-resident)
    # b_ref : (1, COUT_PAD)  f32  blended bias    (grid-resident)
    # o_ref : (TM, COUT_PAD) bf16 lane-dense output tile
    acc = jnp.dot(p_ref[...], w_ref[...], preferred_element_type=jnp.float32)
    o_ref[...] = (acc + b_ref[...]).astype(o_ref.dtype)


def twin_conv(x_nchw, w1, b1, w2, b2, r):
    """x_nchw: (N, CIN, H, W); w*: (COUT, CIN, KH, KW) OIHW; b*: (COUT,); r: float."""
    # Fold the r-blend into the weights (exact for the forward pass).
    # TODO(synk): PyTorch detaches x1; if a backward pass is ever added, a
    # custom VJP must block gradients to (w1, b1) through this fold.
    w_eff = (1.0 - r) * w1 + r * w2                          # OIHW, f32
    b_eff = (1.0 - r) * b1 + r * b2

    # OIHW -> (K, COUT) with K flattened as (cin, kh, kw) to match the feature
    # ordering of conv_general_dilated_patches; lane-pad COUT -> COUT_PAD.
    w_k = w_eff.reshape(COUT, K).T
    w_k = jnp.pad(w_k, ((0, 0), (0, COUT_PAD - COUT))).astype(jnp.bfloat16)
    b_k = jnp.pad(b_eff, (0, COUT_PAD - COUT)).reshape(1, COUT_PAD).astype(jnp.float32)

    # im2col in the wrapper: one fused XLA op, feature dim (cin, kh, kw) minor.
    # TODO(synk): at SD sizes, keep activations NHWC end-to-end and handle the
    # padding=1 halo with a spatial grid + halo blocks instead of materializing
    # the (M, K) slab in HBM.
    patches = jax.lax.conv_general_dilated_patches(
        x_nchw, filter_shape=(KH, KW), window_strides=(1, 1),
        padding=((1, 1), (1, 1)),
        dimension_numbers=("NCHW", "OIHW", "NHWC"))        # (N, H, W, K)
    patches = patches.reshape(M, K).astype(jnp.bfloat16)

    cost = pl.CostEstimate(
        flops=2 * M * K * COUT_PAD,
        transcendentals=0,
        bytes_accessed=(patches.size * 2 + w_k.size * 2 + b_k.size * 4
                        + M * COUT_PAD * 2),
    )

    out2d = pl.pallas_call(
        twin_conv_kernel,
        out_shape=jax.ShapeDtypeStruct((M, COUT_PAD), jnp.bfloat16),
        grid=(pl.cdiv(M, TM),),
        in_specs=[
            pl.BlockSpec((TM, K), lambda i: (i, 0)),         # patch tiles
            pl.BlockSpec((K, COUT_PAD), lambda i: (0, 0)),   # resident weights
            pl.BlockSpec((1, COUT_PAD), lambda i: (0, 0)),   # resident bias
        ],
        out_specs=pl.BlockSpec((TM, COUT_PAD), lambda i: (i, 0)),
        compiler_params=pltpu.CompilerParams(
            dimension_semantics=("parallel",)),              # 2 TCs on v7x
        cost_estimate=cost,
    )(patches, w_k, b_k)

    # Slice off lane padding, restore (N, COUT, H, W) in the wrapper.
    out = out2d[:, :COUT].reshape(N, H, W, COUT)
    return jnp.transpose(out, (0, 3, 1, 2))


def _ref_conv(x_nchw, w, b):
    y = jax.lax.conv_general_dilated(
        x_nchw, w, window_strides=(1, 1), padding=((1, 1), (1, 1)),
        dimension_numbers=("NCHW", "OIHW", "NCHW"),
        precision=jax.lax.Precision.HIGHEST)
    return y + b[None, :, None, None]


if __name__ == "__main__":
    key = jax.random.PRNGKey(0)
    kx, kw1, kb1, kw2, kb2 = jax.random.split(key, 5)

    x = jax.random.normal(kx, (N, CIN, H, W), jnp.float32)
    # Two independent Conv2d(CIN, COUT, 3, padding=1) parameter sets.
    w1 = 0.1 * jax.random.normal(kw1, (COUT, CIN, KH, KW), jnp.float32)
    b1 = 0.1 * jax.random.normal(kb1, (COUT,), jnp.float32)
    w2 = 0.1 * jax.random.normal(kw2, (COUT, CIN, KH, KW), jnp.float32)
    b2 = 0.1 * jax.random.normal(kb2, (COUT,), jnp.float32)
    r = 0.3  # TwinConv.r is assigned externally; fixed scalar here.

    out = jax.jit(twin_conv)(x, w1, b1, w2, b2, r)
    out = jax.block_until_ready(out)

    # Pure-JAX f32 reference (two convs + blend, as in the PyTorch module).
    ref = _ref_conv(x, w1, b1) * (1.0 - r) + _ref_conv(x, w2, b2) * r
    assert out.shape == (N, COUT, H, W)
    # Tolerance accounts for bf16 patch/weight/output rounding (f32 accumulation).
    assert jnp.allclose(out.astype(jnp.float32), ref, atol=3e-2, rtol=3e-2), \
        "mismatch vs reference"

    print("KERNEL_OK")
</pallas_src>

<mosaic_0001>
module attributes {stable_mosaic.version = 11 : i64} {
  func.func @twin_conv_kernel(%arg0: i32, %arg1: memref<256x36xbf16, #tpu.memory_space<vmem>>, %arg2: memref<36x128xbf16, #tpu.memory_space<vmem>>, %arg3: memref<1x128xf32, #tpu.memory_space<vmem>>, %arg4: memref<256x128xbf16, #tpu.memory_space<vmem>>) attributes {dimension_semantics = [#tpu.dimension_semantics<parallel>], iteration_bounds = array<i64: 2>, scalar_prefetch = 0 : i64, scratch_operands = 0 : i64, tpu.core_type = #tpu.core_type<tc>, window_params = [{transform_indices = @transform_0, window_bounds = array<i64: 256, 36>}, {pipeline_mode = #tpu.pipeline_mode<synchronous>, transform_indices = @transform_1, window_bounds = array<i64: 36, 128>}, {pipeline_mode = #tpu.pipeline_mode<synchronous>, transform_indices = @transform_2, window_bounds = array<i64: 1, 128>}, {transform_indices = @transform_3, window_bounds = array<i64: 256, 128>}]} {
    %c0 = arith.constant 0 : index
    %c0_0 = arith.constant 0 : index
    %0 = vector.load %arg1[%c0, %c0_0] : memref<256x36xbf16, #tpu.memory_space<vmem>>, vector<256x36xbf16>
    %c0_1 = arith.constant 0 : index
    %c0_2 = arith.constant 0 : index
    %1 = vector.load %arg2[%c0_1, %c0_2] : memref<36x128xbf16, #tpu.memory_space<vmem>>, vector<36x128xbf16>
    %cst = arith.constant dense<0.000000e+00> : vector<256x128xf32>
    %2 = tpu.matmul %0, %1, %cst {dimension_numbers = #tpu.dot_dimension_numbers<[1], [0], [0], [1], [0, 0, 1, 1], [], []>} : vector<256x36xbf16>, vector<36x128xbf16>, vector<256x128xf32> -> vector<256x128xf32>
    %c0_3 = arith.constant 0 : index
    %c0_4 = arith.constant 0 : index
    %3 = vector.load %arg3[%c0_3, %c0_4] : memref<1x128xf32, #tpu.memory_space<vmem>>, vector<1x128xf32>
    %4 = vector.broadcast %3 : vector<1x128xf32> to vector<256x128xf32>
    %5 = arith.addf %2, %4 : vector<256x128xf32>
    %6 = arith.truncf %5 : vector<256x128xf32> to vector<256x128xbf16>
    %c0_5 = arith.constant 0 : index
    %c0_6 = arith.constant 0 : index
    %7 = vector.load %arg4[%c0_5, %c0_6] : memref<256x128xbf16, #tpu.memory_space<vmem>>, vector<256x128xbf16>
    tpu.vector_store %arg4[%c0_5, %c0_6], %6 {strides = array<i32>} : memref<256x128xbf16, #tpu.memory_space<vmem>>, vector<256x128xbf16>,
    return
  }
  func.func @transform_0(%arg0: i32) -> (i32, i32) {
    %c0_i32 = arith.constant 0 : i32
    %c0_i32_0 = arith.constant 0 : i32
    return %arg0, %c0_i32 : i32, i32
  }
  func.func @transform_1(%arg0: i32) -> (i32, i32) {
    %c0_i32 = arith.constant 0 : i32
    %c0_i32_0 = arith.constant 0 : i32
    %c0_i32_1 = arith.constant 0 : i32
    return %c0_i32, %c0_i32_0 : i32, i32
  }
  func.func @transform_2(%arg0: i32) -> (i32, i32) {
    %c0_i32 = arith.constant 0 : i32
    %c0_i32_0 = arith.constant 0 : i32
    %c0_i32_1 = arith.constant 0 : i32
    return %c0_i32, %c0_i32_0 : i32, i32
  }
  func.func @transform_3(%arg0: i32) -> (i32, i32) {
    %c0_i32 = arith.constant 0 : i32
    %c0_i32_0 = arith.constant 0 : i32
    return %arg0, %c0_i32 : i32, i32
  }
}

</mosaic_0001>

<llo_original>
// kernel: twin_conv.1
$region0: #{twin_conv.1}
  #allocation0 [shape = 'u32[]', space=smem, size = 0x4, offset = 0x4, fixed_abs, tag = 'smem constant byte address 0x4 - core index']
  #allocation1 [shape = 'u32[144,128]{1,0:T(1,128)}', space=vmem, size = 0x12000, scoped, tag = 'internal scratch']
  %s0 = inlined_call_operand.vmem [shape: bf16[512,36], index: 0, kind: input, shape index: {}]
  %s1 = inlined_call_operand.vmem [shape: bf16[36,128], index: 1, kind: input, shape index: {}]
  %s2 = inlined_call_operand.vmem [shape: f32[1,128], index: 2, kind: input, shape index: {}]
  %s3 = inlined_call_operand.hbm [shape: bf16[512,128], index: 3, kind: output, shape index: {}]
  %s4 = sld [smem:[#allocation0]]
  $region45: #{twin_conv.1} parent=0
    _
  %s6 = ssub.s32 1, %s4
  %s7 = scalar_select 0, %s6, %s4
  $region1: #{twin_conv.1} parent=0
    #allocation2 [shape = 'u8[131072]{0}', space=vmem, size = 0x20000, scoped, tag = 'output window, operand 0']
    #allocation3 [shape = 's32[2]{0}', space=sflag, size = 0x8, scoped, tag = 'scoped memory for twin_conv.1']
    %8 = vsyncpa [#allocation3], 0
    %s9 = scalar_lea.sflag [#allocation3], 1
    %10 = vsyncpa %s9, 0
    loop: start=0, step=1, limit=4
    $region2: #{twin_conv.1} parent=1 // loop_pre_header
      _
    $region3: #{twin_conv.1} parent=1 // loop_header
      %s12 = sphi 0, %s16
      %p13 = scmp.ge.s32.totalorder %s12, 4
      %s22 = sphi 0, %s24
      %s25 = sphi 0, %s22
      %s26 = sphi 0, %s25
      %s42 = sphi 0, %s26
      %s46 = sphi 0, %s46
      %s48 = sphi 0, %s46
      %s49 = sphi 0, %s48
      %s63 = sphi 0, %s49
      %s67 = sphi 0, %s67
      %s69 = sphi 0, %s67
      %s70 = sphi 0, %s69
      %s84 = sphi 0, %s70
      %s90 = sphi 0, %s92
      %s93 = sphi 0, %s90
      %s94 = sphi 0, %s93
      %s110 = sphi 0, %s94
    $region4: #{twin_conv.1} parent=1 // loop_header_branch
      %15 = sbr.rel (%p13) target = $region8
    $region5: #{twin_conv.1} parent=1 // loop_body
      %s17 = ssub.s32 %s12, 1
      %s18 = ssub.s32 %s12, 2
      %s19 = sadd.s32 %s12, 1
      %s20 = ssub.s32 %s12, %s19
      %p21 = scmp.eq.s32.totalorder %s20, 0
      %s23 = sadd.s32 %s22, 1
      %s24 = scalar_select %p21, %s22, %s23
      %p27 = pneg %p21
      %p28 = scmp.eq.s32.totalorder %s12, 1
      %p29 = por %p27, %p28
      %p30 = scmp.ne.s32.totalorder %s22, %s25
      %p31 = scmp.eq.s32.totalorder %s12, 0
      %p32 = por %p30, %p31
      %p33 = scmp.ne.s32.totalorder %s22, %s25
      %p34 = scmp.eq.s32.totalorder %s17, 1
      %p35 = por %p33, %p34
      %p36 = scmp.ne.s32.totalorder %s25, %s26
      %p37 = scmp.eq.s32.totalorder %s17, 0
      %p38 = por %p36, %p37
      %p39 = scmp.ne.s32.totalorder %s25, %s26
      %p40 = scmp.eq.s32.totalorder %s18, 1
      %p41 = por %p39, %p40
      %p43 = scmp.ne.s32.totalorder %s26, %s42
      %p44 = scmp.eq.s32.totalorder %s18, 0
      %p45 = por %p43, %p44
      %s47 = sadd.s32 %s46, 1
      %p50 = scmp.eq.s32.totalorder %s12, 1
      %p51 = scmp.ne.s32.totalorder %s46, %s48
      %p52 = scmp.eq.s32.totalorder %s12, 0
      %p53 = por %p51, %p52
      %p54 = scmp.ne.s32.totalorder %s46, %s48
      %p55 = scmp.eq.s32.totalorder %s17, 1
      %p56 = por %p54, %p55
      %p57 = scmp.ne.s32.totalorder %s48, %s49
      %p58 = scmp.eq.s32.totalorder %s17, 0
      %p59 = por %p57, %p58
      %p60 = scmp.ne.s32.totalorder %s48, %s49
      %p61 = scmp.eq.s32.totalorder %s18, 1
      %p62 = por %p60, %p61
      %p64 = scmp.ne.s32.totalorder %s49, %s63
      %p65 = scmp.eq.s32.totalorder %s18, 0
      %p66 = por %p64, %p65
      %s68 = sadd.s32 %s67, 1
      %p71 = scmp.eq.s32.totalorder %s12, 1
      %p72 = scmp.ne.s32.totalorder %s67, %s69
      %p73 = scmp.eq.s32.totalorder %s12, 0
      %p74 = por %p72, %p73
      %p75 = scmp.ne.s32.totalorder %s67, %s69
      %p76 = scmp.eq.s32.totalorder %s17, 1
      %p77 = por %p75, %p76
      %p78 = scmp.ne.s32.totalorder %s69, %s70
      %p79 = scmp.eq.s32.totalorder %s17, 0
      %p80 = por %p78, %p79
      %p81 = scmp.ne.s32.totalorder %s69, %s70
      %p82 = scmp.eq.s32.totalorder %s18, 1
      %p83 = por %p81, %p82
      %p85 = scmp.ne.s32.totalorder %s70, %s84
      %p86 = scmp.eq.s32.totalorder %s18, 0
      %p87 = por %p85, %p86
      %s88 = ssub.s32 %s12, %s19
      %p89 = scmp.eq.s32.totalorder %s88, 0
      %s91 = sadd.s32 %s90, 1
      %s92 = scalar_select %p89, %s90, %s91
      %p95 = pneg %p89
      %p96 = scmp.eq.s32.totalorder %s12, 1
      %p97 = por %p95, %p96
      %p98 = scmp.ne.s32.totalorder %s90, %s93
      %p99 = scmp.eq.s32.totalorder %s12, 0
      %p100 = por %p98, %p99
      %p101 = scmp.ne.s32.totalorder %s90, %s93
      %p102 = scmp.eq.s32.totalorder %s17, 1
      %p103 = por %p101, %p102
      %p104 = scmp.ne.s32.totalorder %s93, %s94
      %p105 = scmp.eq.s32.totalorder %s17, 0
      %p106 = por %p104, %p105
      %p107 = scmp.ne.s32.totalorder %s93, %s94
      %p108 = scmp.eq.s32.totalorder %s18, 1
      %p109 = por %p107, %p108
      %p111 = scmp.ne.s32.totalorder %s94, %s110
      %p112 = scmp.eq.s32.totalorder %s18, 0
      %p113 = por %p111, %p112
      %p114 = scmp.le.s32.totalorder 1, %s12
      %p115 = scmp.lt.s32.totalorder %s12, 3
      %p116 = pnand %p114, %p115
      %p117 = pneg %p116
      // Predicated region
      $region9: #{twin_conv.1} parent=5 // pred_check
        _
      $region10: #{twin_conv.1} parent=5 // pred_check_branch
        %119 = sbr.rel (%p116) target = $region12
      $region11: #{twin_conv.1} parent=5 // pred_region
        %s120 = ssub.s32 %s12, 1
        // Predicated region
        $region13: #{twin_conv.1} parent=11 // pred_check
          %p121 = pneg %p59
        $region14: #{twin_conv.1} parent=11 // pred_check_branch
          %123 = sbr.rel (%p121) target = $region16
        $region15: #{twin_conv.1} parent=11 // pred_region
          _
        $region16: #{twin_conv.1} parent=11 // pred_fallthru
          _
        // Predicated region
        $region17: #{twin_conv.1} parent=11 // pred_check
          %p124 = pneg %p80
        $region18: #{twin_conv.1} parent=11 // pred_check_branch
          %126 = sbr.rel (%p124) target = $region20
        $region19: #{twin_conv.1} parent=11 // pred_region
          _
        $region20: #{twin_conv.1} parent=11 // pred_fallthru
          _
      $region12: #{twin_conv.1} parent=5 // pred_fallthru
        _
      %p127 = scmp.lt.s32.totalorder %s12, 2
      // Predicated region
      $region21: #{twin_conv.1} parent=5 // pred_check
        %p128 = pneg %p127
      $region22: #{twin_conv.1} parent=5 // pred_check_branch
        %130 = sbr.rel (%p128) target = $region24
      $region23: #{twin_conv.1} parent=5 // pred_region
        // Predicated region
        $region25: #{twin_conv.1} parent=23 // pred_check
          %p131 = pneg %p32
        $region26: #{twin_conv.1} parent=23 // pred_check_branch
          %133 = sbr.rel (%p131) target = $region28
        $region27: #{twin_conv.1} parent=23 // pred_region
          %s134 = smul.u32 32, %s12
          %p135 = scmp.lt.s32.totalorder %s134, 63
          %s136 = scalar_select %p135, %s134, 63
          %s137 = smul.addr %s136, 4
          %s138 = scalar_lea.vmem %s0, %s137
          %s139 = smul.u32 32, %s12
        $region28: #{twin_conv.1} parent=23 // pred_fallthru
          _
      $region24: #{twin_conv.1} parent=5 // pred_fallthru
        _
      %p140 = scmp.le.s32.totalorder 1, %s12
      %p141 = scmp.lt.s32.totalorder %s12, 3
      %p142 = pnand %p140, %p141
      %p143 = pneg %p142
      // Predicated region
      $region29: #{twin_conv.1} parent=5 // pred_check
        _
      $region30: #{twin_conv.1} parent=5 // pred_check_branch
        %145 = sbr.rel (%p142) target = $region32
      $region31: #{twin_conv.1} parent=5 // pred_region
        %s146 = ssub.s32 %s12, 1
        %s147 = smul.u32 32, %s17
        %p148 = scmp.lt.s32.totalorder %s147, 63
        %s149 = scalar_select %p148, %s147, 63
        %s150 = smul.addr %s149, 4
        %s151 = scalar_lea.vmem %s0, %s150
        %p152 = pneg %p38
        %p153 = pneg %p35
        %p154 = pneg %p59
        %p155 = pneg %p56
        %p156 = pneg %p80
        %p157 = pneg %p77
        %p158 = pneg %p106
        %p159 = pneg %p103
        %s160 = sand.u32 %s93, 1
        %s161 = scalar_lea.sflag [#allocation3], %s160
        %s162 = sand.u32 %s93, 1
        %s163 = smul.addr %s162, 128
        %s164 = scalar_lea.vmem [#allocation2], %s163
        %s165 = smul.u32 32, %s17
        %p166 = scmp.lt.s32.totalorder %s165, 63
        %s167 = scalar_select %p166, %s165, 63
        %s168 = smul.addr %s167, 4
        %s169 = scalar_lea.vmem %s0, %s168
        %s170 = smul.u32 32, %s17
        %s171 = smul.u32 32, %s17
        %v173 = vld [vmem:[%s169] sm:$0xf]
        %v174 = vld [vmem:[%s169 + $0x4] sm:$0xf]
        %v175 = vld [vmem:[%s169 + $0x8] sm:$0xf]
        %v176 = vld [vmem:[%s169 + $0xc] sm:$0xf]
        %v177 = vld [vmem:[%s169 + $0x10] sm:$0xf]
        %v178 = vld [vmem:[%s169 + $0x14] sm:$0xf]
        %v179 = vld [vmem:[%s169 + $0x18] sm:$0xf]
        %v180 = vld [vmem:[%s169 + $0x1c] sm:$0xf]
        %v181 = vld [vmem:[%s169 + $0x20] sm:$0xf]
        %v182 = vld [vmem:[%s169 + $0x24] sm:$0xf]
        %v183 = vld [vmem:[%s169 + $0x28] sm:$0xf]
        %v184 = vld [vmem:[%s169 + $0x2c] sm:$0xf]
        %v185 = vld [vmem:[%s169 + $0x30] sm:$0xf]
        %v186 = vld [vmem:[%s169 + $0x34] sm:$0xf]
        %v187 = vld [vmem:[%s169 + $0x38] sm:$0xf]
        %v188 = vld [vmem:[%s169 + $0x3c] sm:$0xf]
        %v189 = vld [vmem:[%s169 + $0x40] sm:$0xf]
        %v190 = vld [vmem:[%s169 + $0x44] sm:$0xf]
        %v191 = vld [vmem:[%s169 + $0x48] sm:$0xf]
        %v192 = vld [vmem:[%s169 + $0x4c] sm:$0xf]
        %v193 = vld [vmem:[%s169 + $0x50] sm:$0xf]
        %v194 = vld [vmem:[%s169 + $0x54] sm:$0xf]
        %v195 = vld [vmem:[%s169 + $0x58] sm:$0xf]
        %v196 = vld [vmem:[%s169 + $0x5c] sm:$0xf]
        %v197 = vld [vmem:[%s169 + $0x60] sm:$0xf]
        %v198 = vld [vmem:[%s169 + $0x64] sm:$0xf]
        %v199 = vld [vmem:[%s169 + $0x68] sm:$0xf]
        %v200 = vld [vmem:[%s169 + $0x6c] sm:$0xf]
        %v201 = vld [vmem:[%s169 + $0x70] sm:$0xf]
        %v202 = vld [vmem:[%s169 + $0x74] sm:$0xf]
        %v203 = vld [vmem:[%s169 + $0x78] sm:$0xf]
        %v204 = vld [vmem:[%s169 + $0x7c] sm:$0xf]
        %v205 = vld [vmem:[%s1] sm:$0xf]
        %v206 = vld [vmem:[%s1 + $0x4] sm:$0xf]
        %v207 = vld [vmem:[%s1 + $0x8] sm:$0xf]
        %v208 = vld [vmem:[%s1 + $0xc] sm:$0xf]
        %v209 = vld [vmem:[%s1 + $0x10] sm:$0x3]
        %v210 = vld [vmem:[%s2] sm:$0x1]
        %v212 = vlaneseq
        %v213 = vshrl.u32 %v212, 7
        %v214 = vsub.s32 0, %v213
        %v215 = vrot.slane %v210, %v214
        %v249 = vunpack.c.l.b16 %v173
        %v250 = vunpack.c.l.b16 %v174
        %v251 = vunpack.c.l.b16 %v175
        %v252 = vunpack.c.l.b16 %v176
        %v253 = vunpack.c.l.b16 %v177
        %v254 = vunpack.c.l.b16 %v178
        %v255 = vunpack.c.l.b16 %v179
        %v256 = vunpack.c.l.b16 %v180
        %v257 = vunpack.c.l.b16 %v181
        %v258 = vunpack.c.l.b16 %v182
        %v259 = vunpack.c.l.b16 %v183
        %v260 = vunpack.c.l.b16 %v184
        %v261 = vunpack.c.l.b16 %v185
        %v262 = vunpack.c.l.b16 %v186
        %v263 = vunpack.c.l.b16 %v187
        %v264 = vunpack.c.l.b16 %v188
        %v265 = vunpack.c.l.b16 %v189
        %v266 = vunpack.c.l.b16 %v190
        %v267 = vunpack.c.l.b16 %v191
        %v268 = vunpack.c.l.b16 %v192
        %v269 = vunpack.c.l.b16 %v193
        %v270 = vunpack.c.l.b16 %v194
        %v271 = vunpack.c.l.b16 %v195
        %v272 = vunpack.c.l.b16 %v196
        %v273 = vunpack.c.l.b16 %v197
        %v274 = vunpack.c.l.b16 %v198
        %v275 = vunpack.c.l.b16 %v199
        %v276 = vunpack.c.l.b16 %v200
        %v277 = vunpack.c.l.b16 %v201
        %v278 = vunpack.c.l.b16 %v202
        %v279 = vunpack.c.l.b16 %v203
        %v280 = vunpack.c.l.b16 %v204
        %v281 = vpack.c.b16 %v250, %v249
        %v282 = vpack.c.b16 %v252, %v251
        %v283 = vpack.c.b16 %v254, %v253
        %v284 = vpack.c.b16 %v256, %v255
        %v285 = vpack.c.b16 %v258, %v257
        %v286 = vpack.c.b16 %v260, %v259
        %v287 = vpack.c.b16 %v262, %v261
        %v288 = vpack.c.b16 %v264, %v263
        %v289 = vpack.c.b16 %v266, %v265
        %v290 = vpack.c.b16 %v268, %v267
        %v291 = vpack.c.b16 %v270, %v269
        %v292 = vpack.c.b16 %v272, %v271
        %v293 = vpack.c.b16 %v274, %v273
        %v294 = vpack.c.b16 %v276, %v275
        %v295 = vpack.c.b16 %v278, %v277
        %v296 = vpack.c.b16 %v280, %v279
        %v302 = vunpack.c.l.b16 %v205
        %v303 = vunpack.c.l.b16 %v206
        %v304 = vunpack.c.l.b16 %v207
        %v305 = vunpack.c.l.b16 %v208
        %v306 = vunpack.c.l.b16 %v209
        %v307 = vpack.c.b16 %v303, %v302
        %v308 = vpack.c.b16 %v305, %v304
        %v309 = vpack.c.b16 %v306, %v306
        %vm312 = vcmask 293888
        %v314 = vsel %vm312, %v281, 0
        %v317 = vsel %vm312, %v282, 0
        %v320 = vsel %vm312, %v283, 0
        %v323 = vsel %vm312, %v284, 0
        %v326 = vsel %vm312, %v285, 0
        %v329 = vsel %vm312, %v286, 0
        %v332 = vsel %vm312, %v287, 0
        %v335 = vsel %vm312, %v288, 0
        %v338 = vsel %vm312, %v289, 0
        %v341 = vsel %vm312, %v290, 0
        %v344 = vsel %vm312, %v291, 0
        %v347 = vsel %vm312, %v292, 0
        %v350 = vsel %vm312, %v293, 0
        %v353 = vsel %vm312, %v294, 0
        %v356 = vsel %vm312, %v295, 0
        %v359 = vsel %vm312, %v296, 0
        %vm361 = vcmask 1041408
        %v363 = vsel %vm361, %v309, 0
        %365 = vmatprep.subr.bf16.mxu0 0
        %366 = vmatpush1.bf16.msra.mxu0 0
        %367 = vmatprep.subr.bf16.mxu0 0
        %368 = vmatpush1.bf16.msra.mxu0 0
        %369 = vmatprep.subr.bf16.mxu0 0
        %370 = vmatpush1.bf16.msra.mxu0 0
        %371 = vmatprep.subr.bf16.mxu0 0
        %372 = vmatpush1.bf16.msra.mxu0 0
        %373 = vmatprep.subr.bf16.mxu0 0
        %374 = vmatpush1.bf16.msra.mxu0 0
        %375 = vmatprep.subr.bf16.mxu0 0
        %376 = vmatpush1.bf16.msra.mxu0 %v363
        %377 = vmatprep.subr.bf16.mxu0 0
        %378 = vmatpush1.bf16.msra.mxu0 %v308
        %379 = vmatprep.subr.bf16.mxu0 0
        %380 = vmatpush1.bf16.msra.mxu0 %v307
        %381 = vmatprep.subr.bf16.mxu0 0
        %382 = vmatpush2.bf16.msra.mxu0 0
        %383 = vmatprep.subr.bf16.mxu0 0
        %384 = vmatpush2.bf16.msra.mxu0 0
        %385 = vmatprep.subr.bf16.mxu0 0
        %386 = vmatpush2.bf16.msra.mxu0 0
        %387 = vmatprep.subr.bf16.mxu0 0
        %388 = vmatpush2.bf16.msra.mxu0 0
        %389 = vmatprep.subr.bf16.mxu0 0
        %390 = vmatpush2.bf16.msra.mxu0 0
        %391 = vmatprep.subr.bf16.mxu0 0
        %392 = vmatpush2.bf16.msra.mxu0 0
        %393 = vmatprep.subr.bf16.mxu0 0
        %394 = vmatpush2.bf16.msra.mxu0 0
        %395 = vmatprep.subr.bf16.mxu0 0
        %396 = vmatpush2.bf16.msra.mxu0 0
        %397 = vmatprep.mubr.bf16.mxu0 0
        %398 = vmatmul.mubr.bf16.gmra.mxu0 %v314
        %v399 = vpop.f32.mrf.mxu0
        %v400 = vadd.f32 %v215, %v399
        %v401 = vpop.f32.mrf.mxu0
        %v402 = vpop.f32.mrf.mxu0
        %v403 = vadd.f32 %v215, %v402
        %v404 = vpop.f32.mrf.mxu0
        %405 = vmatprep.mubr.bf16.mxu0 0
        %406 = vmatmul.mubr.bf16.gmra.mxu0 %v317
        %v407 = vpop.f32.mrf.mxu0
        %v408 = vadd.f32 %v215, %v407
        %v409 = vpop.f32.mrf.mxu0
        %v410 = vpop.f32.mrf.mxu0
        %v411 = vadd.f32 %v215, %v410
        %v412 = vpop.f32.mrf.mxu0
        %413 = vmatprep.mubr.bf16.mxu0 0
        %414 = vmatmul.mubr.bf16.gmra.mxu0 %v320
        %v415 = vpop.f32.mrf.mxu0
        %v416 = vadd.f32 %v215, %v415
        %v417 = vpop.f32.mrf.mxu0
        %v418 = vpop.f32.mrf.mxu0
        %v419 = vadd.f32 %v215, %v418
        %v420 = vpop.f32.mrf.mxu0
        %421 = vmatprep.mubr.bf16.mxu0 0
        %422 = vmatmul.mubr.bf16.gmra.mxu0 %v323
        %v423 = vpop.f32.mrf.mxu0
        %v424 = vadd.f32 %v215, %v423
        %v425 = vpop.f32.mrf.mxu0
        %v426 = vpop.f32.mrf.mxu0
        %v427 = vadd.f32 %v215, %v426
        %v428 = vpop.f32.mrf.mxu0
        %429 = vmatprep.mubr.bf16.mxu0 0
        %430 = vmatmul.mubr.bf16.gmra.mxu0 %v326
        %v431 = vpop.f32.mrf.mxu0
        %v432 = vadd.f32 %v215, %v431
        %v433 = vpop.f32.mrf.mxu0
        %v434 = vpop.f32.mrf.mxu0
        %v435 = vadd.f32 %v215, %v434
        %v436 = vpop.f32.mrf.mxu0
        %437 = vmatprep.mubr.bf16.mxu0 0
        %438 = vmatmul.mubr.bf16.gmra.mxu0 %v329
        %v439 = vpop.f32.mrf.mxu0
        %v440 = vadd.f32 %v215, %v439
        %v441 = vpop.f32.mrf.mxu0
        %v442 = vpop.f32.mrf.mxu0
        %v443 = vadd.f32 %v215, %v442
        %v444 = vpop.f32.mrf.mxu0
        %445 = vmatprep.mubr.bf16.mxu0 0
        %446 = vmatmul.mubr.bf16.gmra.mxu0 %v332
        %v447 = vpop.f32.mrf.mxu0
        %v448 = vadd.f32 %v215, %v447
        %v449 = vpop.f32.mrf.mxu0
        %v450 = vpop.f32.mrf.mxu0
        %v451 = vadd.f32 %v215, %v450
        %v452 = vpop.f32.mrf.mxu0
        %453 = vmatprep.mubr.bf16.mxu0 0
        %454 = vmatmul.mubr.bf16.gmra.mxu0 %v335
        %v455 = vpop.f32.mrf.mxu0
        %v456 = vadd.f32 %v215, %v455
        %v457 = vpop.f32.mrf.mxu0
        %v458 = vpop.f32.mrf.mxu0
        %v459 = vadd.f32 %v215, %v458
        %v460 = vpop.f32.mrf.mxu0
        %461 = vmatprep.mubr.bf16.mxu0 0
        %462 = vmatmul.mubr.bf16.gmra.mxu0 %v338
        %v463 = vpop.f32.mrf.mxu0
        %v464 = vadd.f32 %v215, %v463
        %v465 = vpop.f32.mrf.mxu0
        %v466 = vpop.f32.mrf.mxu0
        %v467 = vadd.f32 %v215, %v466
        %v468 = vpop.f32.mrf.mxu0
        %469 = vmatprep.mubr.bf16.mxu0 0
        %470 = vmatmul.mubr.bf16.gmra.mxu0 %v341
        %v471 = vpop.f32.mrf.mxu0
        %v472 = vadd.f32 %v215, %v471
        %v473 = vpop.f32.mrf.mxu0
        %v474 = vpop.f32.mrf.mxu0
        %v475 = vadd.f32 %v215, %v474
        %v476 = vpop.f32.mrf.mxu0
        %477 = vmatprep.mubr.bf16.mxu0 0
        %478 = vmatmul.mubr.bf16.gmra.mxu0 %v344
        %v479 = vpop.f32.mrf.mxu0
        %v480 = vadd.f32 %v215, %v479
        %v481 = vpop.f32.mrf.mxu0
        %v482 = vpop.f32.mrf.mxu0
        %v483 = vadd.f32 %v215, %v482
        %v484 = vpop.f32.mrf.mxu0
        %485 = vmatprep.mubr.bf16.mxu0 0
        %486 = vmatmul.mubr.bf16.gmra.mxu0 %v347
        %v487 = vpop.f32.mrf.mxu0
        %v488 = vadd.f32 %v215, %v487
        %v489 = vpop.f32.mrf.mxu0
        %v490 = vpop.f32.mrf.mxu0
        %v491 = vadd.f32 %v215, %v490
        %v492 = vpop.f32.mrf.mxu0
        %493 = vmatprep.mubr.bf16.mxu0 0
        %494 = vmatmul.mubr.bf16.gmra.mxu0 %v350
        %v495 = vpop.f32.mrf.mxu0
        %v496 = vadd.f32 %v215, %v495
        %v497 = vpop.f32.mrf.mxu0
        %v498 = vpop.f32.mrf.mxu0
        %v499 = vadd.f32 %v215, %v498
        %v500 = vpop.f32.mrf.mxu0
        %501 = vmatprep.mubr.bf16.mxu0 0
        %502 = vmatmul.mubr.bf16.gmra.mxu0 %v353
        %v503 = vpop.f32.mrf.mxu0
        %v504 = vadd.f32 %v215, %v503
        %v505 = vpop.f32.mrf.mxu0
        %v506 = vpop.f32.mrf.mxu0
        %v507 = vadd.f32 %v215, %v506
        %v508 = vpop.f32.mrf.mxu0
        %509 = vmatprep.mubr.bf16.mxu0 0
        %510 = vmatmul.mubr.bf16.gmra.mxu0 %v356
        %v511 = vpop.f32.mrf.mxu0
        %v512 = vadd.f32 %v215, %v511
        %v513 = vpop.f32.mrf.mxu0
        %v514 = vpop.f32.mrf.mxu0
        %v515 = vadd.f32 %v215, %v514
        %v516 = vpop.f32.mrf.mxu0
        %517 = vmatprep.mubr.bf16.mxu0 0
        %518 = vmatmul.mubr.bf16.gmra.mxu0 %v359
        %v519 = vpop.f32.mrf.mxu0
        %v520 = vadd.f32 %v215, %v519
        %v521 = vpop.f32.mrf.mxu0
        %v522 = vpop.f32.mrf.mxu0
        %v523 = vadd.f32 %v215, %v522
        %v524 = vpop.f32.mrf.mxu0
        %525 = vdwg.mxu0
        %v526 = vpack.c.bf16 %v403, %v400
        %v527 = vpack.c.bf16 %v411, %v408
        %v528 = vpack.c.bf16 %v419, %v416
        %v529 = vpack.c.bf16 %v427, %v424
        %v530 = vpack.c.bf16 %v435, %v432
        %v531 = vpack.c.bf16 %v443, %v440
        %v532 = vpack.c.bf16 %v451, %v448
        %v533 = vpack.c.bf16 %v459, %v456
        %v534 = vpack.c.bf16 %v467, %v464
        %v535 = vpack.c.bf16 %v475, %v472
        %v536 = vpack.c.bf16 %v483, %v480
        %v537 = vpack.c.bf16 %v491, %v488
        %v538 = vpack.c.bf16 %v499, %v496
        %v539 = vpack.c.bf16 %v507, %v504
        %v540 = vpack.c.bf16 %v515, %v512
        %v541 = vpack.c.bf16 %v523, %v520
        %v558 = vunpack.c.l.b16 %v526
        %v559 = vunpack.c.h.b16 %v526
        %v560 = vunpack.c.l.b16 %v527
        %v561 = vunpack.c.h.b16 %v527
        %v562 = vunpack.c.l.b16 %v528
        %v563 = vunpack.c.h.b16 %v528
        %v564 = vunpack.c.l.b16 %v529
        %v565 = vunpack.c.h.b16 %v529
        %v566 = vunpack.c.l.b16 %v530
        %v567 = vunpack.c.h.b16 %v530
        %v568 = vunpack.c.l.b16 %v531
        %v569 = vunpack.c.h.b16 %v531
        %v570 = vunpack.c.l.b16 %v532
        %v571 = vunpack.c.h.b16 %v532
        %v572 = vunpack.c.l.b16 %v533
        %v573 = vunpack.c.h.b16 %v533
        %v574 = vunpack.c.l.b16 %v534
        %v575 = vunpack.c.h.b16 %v534
        %v576 = vunpack.c.l.b16 %v535
        %v577 = vunpack.c.h.b16 %v535
        %v578 = vunpack.c.l.b16 %v536
        %v579 = vunpack.c.h.b16 %v536
        %v580 = vunpack.c.l.b16 %v537
        %v581 = vunpack.c.h.b16 %v537
        %v582 = vunpack.c.l.b16 %v538
        %v583 = vunpack.c.h.b16 %v538
        %v584 = vunpack.c.l.b16 %v539
        %v585 = vunpack.c.h.b16 %v539
        %v586 = vunpack.c.l.b16 %v540
        %v587 = vunpack.c.h.b16 %v540
        %v588 = vunpack.c.l.b16 %v541
        %v589 = vunpack.c.h.b16 %v541
        %v590 = vpack.c.b16 %v558, %v558
        %v591 = vpack.c.b16 %v559, %v559
        %v592 = vpack.c.b16 %v560, %v560
        %v593 = vpack.c.b16 %v561, %v561
        %v594 = vpack.c.b16 %v562, %v562
        %v595 = vpack.c.b16 %v563, %v563
        %v596 = vpack.c.b16 %v564, %v564
        %v597 = vpack.c.b16 %v565, %v565
        %v598 = vpack.c.b16 %v566, %v566
        %v599 = vpack.c.b16 %v567, %v567
        %v600 = vpack.c.b16 %v568, %v568
        %v601 = vpack.c.b16 %v569, %v569
        %v602 = vpack.c.b16 %v570, %v570
        %v603 = vpack.c.b16 %v571, %v571
        %v604 = vpack.c.b16 %v572, %v572
        %v605 = vpack.c.b16 %v573, %v573
        %v606 = vpack.c.b16 %v574, %v574
        %v607 = vpack.c.b16 %v575, %v575
        %v608 = vpack.c.b16 %v576, %v576
        %v609 = vpack.c.b16 %v577, %v577
        %v610 = vpack.c.b16 %v578, %v578
        %v611 = vpack.c.b16 %v579, %v579
        %v612 = vpack.c.b16 %v580, %v580
        %v613 = vpack.c.b16 %v581, %v581
        %v614 = vpack.c.b16 %v582, %v582
        %v615 = vpack.c.b16 %v583, %v583
        %v616 = vpack.c.b16 %v584, %v584
        %v617 = vpack.c.b16 %v585, %v585
        %v618 = vpack.c.b16 %v586, %v586
        %v619 = vpack.c.b16 %v587, %v587
        %v620 = vpack.c.b16 %v588, %v588
        %v621 = vpack.c.b16 %v589, %v589
        %654 = vst [vmem:[%s164] sm:$0xf] %v590
        %655 = vst [vmem:[%s164 + $0x4] sm:$0xf] %v591
        %656 = vst [vmem:[%s164 + $0x8] sm:$0xf] %v592
        %657 = vst [vmem:[%s164 + $0xc] sm:$0xf] %v593
        %658 = vst [vmem:[%s164 + $0x10] sm:$0xf] %v594
        %659 = vst [vmem:[%s164 + $0x14] sm:$0xf] %v595
        %660 = vst [vmem:[%s164 + $0x18] sm:$0xf] %v596
        %661 = vst [vmem:[%s164 + $0x1c] sm:$0xf] %v597
        %662 = vst [vmem:[%s164 + $0x20] sm:$0xf] %v598
        %663 = vst [vmem:[%s164 + $0x24] sm:$0xf] %v599
        %664 = vst [vmem:[%s164 + $0x28] sm:$0xf] %v600
        %665 = vst [vmem:[%s164 + $0x2c] sm:$0xf] %v601
        %666 = vst [vmem:[%s164 + $0x30] sm:$0xf] %v602
        %667 = vst [vmem:[%s164 + $0x34] sm:$0xf] %v603
        %668 = vst [vmem:[%s164 + $0x38] sm:$0xf] %v604
        %669 = vst [vmem:[%s164 + $0x3c] sm:$0xf] %v605
        %670 = vst [vmem:[%s164 + $0x40] sm:$0xf] %v606
        %671 = vst [vmem:[%s164 + $0x44] sm:$0xf] %v607
        %672 = vst [vmem:[%s164 + $0x48] sm:$0xf] %v608
        %673 = vst [vmem:[%s164 + $0x4c] sm:$0xf] %v609
        %674 = vst [vmem:[%s164 + $0x50] sm:$0xf] %v610
        %675 = vst [vmem:[%s164 + $0x54] sm:$0xf] %v611
        %676 = vst [vmem:[%s164 + $0x58] sm:$0xf] %v612
        %677 = vst [vmem:[%s164 + $0x5c] sm:$0xf] %v613
        %678 = vst [vmem:[%s164 + $0x60] sm:$0xf] %v614
        %679 = vst [vmem:[%s164 + $0x64] sm:$0xf] %v615
        %680 = vst [vmem:[%s164 + $0x68] sm:$0xf] %v616
        %681 = vst [vmem:[%s164 + $0x6c] sm:$0xf] %v617
        %682 = vst [vmem:[%s164 + $0x70] sm:$0xf] %v618
        %683 = vst [vmem:[%s164 + $0x74] sm:$0xf] %v619
        %684 = vst [vmem:[%s164 + $0x78] sm:$0xf] %v620
        %685 = vst [vmem:[%s164 + $0x7c] sm:$0xf] %v621
        %s686 = sand.u32 %s93, 1
        %s687 = scalar_lea.sflag [#allocation3], %s686
        %s688 = sand.u32 %s93, 1
        %s689 = smul.addr %s688, 128
        %s690 = scalar_lea.vmem [#allocation2], %s689
        // Predicated region
        $region33: #{twin_conv.1} parent=31 // pred_check
          %p691 = pneg %p103
        $region34: #{twin_conv.1} parent=31 // pred_check_branch
          %693 = sbr.rel (%p691) target = $region36
        $region35: #{twin_conv.1} parent=31 // pred_region
          %s694 = smul.u32 32, %s17
          %s696 = ssub.s32 2048, 2048
          %697 = vsyncadd %s687, %s696
          %s698 = smul.addr %s694, 64
          %s699 = scalar_lea.hbm %s3, %s698
          %s700 = sshll.u32 %s690, 4
          %s701 = int_to_ptr.vmem [resolvable:$true] %s700
          %706 = dma.vmem_to_hbm [thread:$0]  %s701, 2048, %s699, %s687, 64, 64, 4
        $region36: #{twin_conv.1} parent=31 // pred_fallthru
          _
      $region32: #{twin_conv.1} parent=5 // pred_fallthru
        _
      %p707 = scmp.le.s32.totalorder 2, %s12
      // Predicated region
      $region37: #{twin_conv.1} parent=5 // pred_check
        %p708 = pneg %p707
      $region38: #{twin_conv.1} parent=5 // pred_check_branch
        %710 = sbr.rel (%p708) target = $region40
      $region39: #{twin_conv.1} parent=5 // pred_region
        %s711 = ssub.s32 %s12, 2
        // Predicated region
        $region41: #{twin_conv.1} parent=39 // pred_check
          %p712 = pneg %p109
        $region42: #{twin_conv.1} parent=39 // pred_check_branch
          %714 = sbr.rel (%p712) target = $region44
        $region43: #{twin_conv.1} parent=39 // pred_region
          %s715 = sand.u32 %s94, 1
          %s716 = scalar_lea.sflag [#allocation3], %s715
          %s717 = sand.u32 %s94, 1
          %s718 = smul.addr %s717, 128
          %s719 = scalar_lea.vmem [#allocation2], %s718
          %720 = dma.done %s716, 2048
        $region44: #{twin_conv.1} parent=39 // pred_fallthru
          _
      $region40: #{twin_conv.1} parent=5 // pred_fallthru
        _
    $region6: #{twin_conv.1} parent=1 // loop_footer
      %s16 = sadd.s32 1, %s12
    $region7: #{twin_conv.1} parent=1 // loop_footer_branch
      %11 = sbr.rel target = $region3
    $region8: #{twin_conv.1} parent=1 // loop_exit
      _
    %721 = vsyncpa [#allocation3], 1
    %s722 = scalar_lea.sflag [#allocation3], 1
    %723 = vsyncpa %s722, 1

</llo_original>
